<compile_context>
chip_gen: v5e
topology: v5e:2x2
jax: 0.10.0
libtpu: 0.0.40
codegen_flags: <defaults>
</compile_context>

<pallas_src>
import functools
import math

import jax
import jax.numpy as jnp
from jax.experimental import pallas as pl
from jax.experimental.pallas import tpu as pltpu


def _self_distill_kernel(steps_ref, w_ref, b_ref, labels_ref, rowblk_ref,
                         colblk_ref, colcls_ref, op_ref, out_ref, *,
                         depth, B, T, alpha, beta):
    DB, dim = steps_ref.shape            # DB = depth * B
    inv_T = 1.0 / float(T)
    w_ce = (1.0 - float(alpha)) / float(B)
    w_kl = float(alpha) / float(B)
    w_l2 = float(beta) / float(B * dim)
    log_depth = math.log(float(depth))
    NEG = jnp.float32(-1e30)             # finite "-inf": exp() -> exactly 0, no nan

    steps = steps_ref[...]               # (DB, dim)
    w = w_ref[...]                       # (dim, DN)   DN = depth * num_cls
    b = b_ref[...]                       # (1, DN)
    labels = labels_ref[...]             # (DB, 1) int32, tiled per depth block
    row_blk = rowblk_ref[...]            # (DB, 1) int32: depth index of each row
    col_blk = colblk_ref[...]            # (1, DN) int32: depth index of each column
    col_cls = colcls_ref[...]            # (1, DN) int32: class index of each column
    op_t = op_ref[...]                   # (DB, DN) teacher logits, tiled

    # --- all depth classifiers in ONE MXU pass: (DB, dim) @ (dim, DN) ---
    logits = jax.lax.dot_general(
        steps, w, dimension_numbers=(((1,), (0,)), ((), ())),
        preferred_element_type=jnp.float32) + b              # (DB, DN)

    # Block-diagonal selection: row's depth block must match column's block.
    sel_b = row_blk == col_blk                                # (DB, DN) bool
    sel = sel_b.astype(jnp.float32)
    masked = jnp.where(sel_b, logits, NEG)

    # --- CrossEntropyLoss per row (mean over batch folded into w_ce) ---
    m = jnp.max(masked, axis=-1, keepdims=True)               # per-depth row max
    lse = m + jnp.log(jnp.sum(jnp.exp(masked - m), axis=-1, keepdims=True))
    onehot = jnp.logical_and(sel_b, col_cls == labels).astype(jnp.float32)
    true_logit = jnp.sum(onehot * logits, axis=-1, keepdims=True)
    ce_rows = lse - true_logit                                # (DB, 1)

    # --- Teacher tempered log-softmax on the same flat layout ---
    # Each row holds `depth` identical copies of op_last[b]/T, so the full-row
    # logsumexp equals the per-block logsumexp + log(depth).
    t = op_t * inv_T
    tm = jnp.max(t, axis=-1, keepdims=True)
    t_lse = tm + jnp.log(jnp.sum(jnp.exp(t - tm), axis=-1, keepdims=True))
    t_logp = t - t_lse + log_depth                            # correct per-class log p
    t_p_sel = sel * jnp.exp(t_logp)                           # p on valid block, 0 elsewhere

    # --- Student tempered log-softmax; reuse untempered max (T > 0) ---
    s = masked * inv_T
    sm = m * inv_T
    s_lse = sm + jnp.log(jnp.sum(jnp.exp(s - sm), axis=-1, keepdims=True))
    s_logp = s - s_lse
    # KL per row: sum_k p*(log p - log q)  -- self and cross share one reduction.
    kl_rows = jnp.sum(t_p_sel * (t_logp - s_logp), axis=-1, keepdims=True)

    # --- MSELoss(steps[i], steps[-1]) per row (last block contributes 0) ---
    last = steps[(depth - 1) * B:, :]                         # (B, dim), static slice
    last_rep = jnp.concatenate([last] * depth, axis=0)        # (DB, dim)
    diff = steps - last_rep
    mse_rows = jnp.sum(diff * diff, axis=-1, keepdims=True)   # (DB, 1)

    # --- single fused accumulator, single final reduction, single store ---
    row_acc = w_ce * ce_rows + w_kl * kl_rows + w_l2 * mse_rows
    total = jnp.sum(row_acc)
    out_ref[...] = jnp.broadcast_to(total, (1, 1)).astype(jnp.float32)


def self_distillation_loss(op_last, steps, labels, weights, biases, T, alpha, beta):
    assert T > 0, "Temperature must be > 0 (tempered max reuses the untempered max)."
    depth, B, dim = steps.shape
    num_cls = weights.shape[-1]
    DB, DN = depth * B, depth * num_cls

    # Host-side layout prep (all tiny / free XLA ops).
    steps_flat = steps.reshape(DB, dim).astype(jnp.float32)
    w_cat = jnp.transpose(weights, (1, 0, 2)).reshape(dim, DN).astype(jnp.float32)
    b_cat = biases.reshape(1, DN).astype(jnp.float32)
    labels_flat = jnp.tile(labels.astype(jnp.int32), depth).reshape(DB, 1)
    row_blk = jnp.repeat(jnp.arange(depth, dtype=jnp.int32), B).reshape(DB, 1)
    col_blk = jnp.repeat(jnp.arange(depth, dtype=jnp.int32), num_cls).reshape(1, DN)
    col_cls = jnp.tile(jnp.arange(num_cls, dtype=jnp.int32), depth).reshape(1, DN)
    op_tiled = jnp.tile(op_last.astype(jnp.float32), (depth, depth))   # (DB, DN)

    kernel = functools.partial(
        _self_distill_kernel, depth=depth, B=B,
        T=float(T), alpha=float(alpha), beta=float(beta))

    vmem = pl.BlockSpec(memory_space=pltpu.MemorySpace.VMEM)
    out = pl.pallas_call(
        kernel,
        out_shape=jax.ShapeDtypeStruct((1, 1), jnp.float32),
        in_specs=[vmem] * 8,
        out_specs=pl.BlockSpec(memory_space=pltpu.MemorySpace.VMEM),
    )(steps_flat, w_cat, b_cat, labels_flat, row_blk, col_blk, col_cls, op_tiled)
    return out[0, 0]


def _reference_loss(op_last, steps, labels, weights, biases, T, alpha, beta):
    # Pure-JAX mirror of the PyTorch module (note: module does NOT scale KL by T*T).
    depth, B, _ = steps.shape
    last = steps[-1]
    total_ce = 0.0
    total_kl = 0.0
    total_l2 = 0.0
    for i in range(depth):
        logits = steps[i] @ weights[i] + biases[i][0]
        logp = jax.nn.log_softmax(logits, axis=1)
        total_ce = total_ce + (-jnp.mean(logp[jnp.arange(B), labels]))
        s_logp = jax.nn.log_softmax(logits / T, axis=1)
        t_p = jax.nn.softmax(op_last / T, axis=1)
        total_kl = total_kl + jnp.sum(t_p * (jnp.log(t_p) - s_logp)) / B
        total_l2 = total_l2 + jnp.mean((steps[i] - last) ** 2)
    return (1.0 - alpha) * total_ce + alpha * total_kl + beta * total_l2


if __name__ == "__main__":
    depth, B, dim, num_cls = 4, 8, 32, 10
    T, alpha, beta = 2.0, 0.5, 0.1

    key = jax.random.PRNGKey(0)
    k1, k2, k3, k4, k5 = jax.random.split(key, 5)
    steps = jax.random.normal(k1, (depth, B, dim), dtype=jnp.float32)
    op_last = jax.random.normal(k2, (B, num_cls), dtype=jnp.float32)
    labels = jax.random.randint(k3, (B,), 0, num_cls, dtype=jnp.int32)
    # Deterministic synthetic classifier parameters (depth x Linear(dim, num_cls)).
    weights = 0.1 * jax.random.normal(k4, (depth, dim, num_cls), dtype=jnp.float32)
    biases = 0.1 * jax.random.normal(k5, (depth, 1, num_cls), dtype=jnp.float32)

    loss = self_distillation_loss(op_last, steps, labels, weights, biases, T, alpha, beta)
    loss = jax.block_until_ready(loss)

    ref = _reference_loss(op_last, steps, labels, weights, biases, T, alpha, beta)
    assert abs(float(loss) - float(ref)) < 1e-3, (float(loss), float(ref))

    print("KERNEL_OK")
</pallas_src>

<mosaic_0001>
module attributes {stable_mosaic.version = 11 : i64} {
  func.func @_self_distill_kernel(%arg0: memref<32x32xf32, #tpu.memory_space<vmem>>, %arg1: memref<32x40xf32, #tpu.memory_space<vmem>>, %arg2: memref<1x40xf32, #tpu.memory_space<vmem>>, %arg3: memref<32x1xi32, #tpu.memory_space<vmem>>, %arg4: memref<32x1xi32, #tpu.memory_space<vmem>>, %arg5: memref<1x40xi32, #tpu.memory_space<vmem>>, %arg6: memref<1x40xi32, #tpu.memory_space<vmem>>, %arg7: memref<32x40xf32, #tpu.memory_space<vmem>>, %arg8: memref<1x1xf32, #tpu.memory_space<vmem>>) attributes {dimension_semantics = [], scalar_prefetch = 0 : i64, scratch_operands = 0 : i64, tpu.core_type = #tpu.core_type<tc>} {
    %c0 = arith.constant 0 : index
    %c0_0 = arith.constant 0 : index
    %0 = vector.load %arg0[%c0, %c0_0] : memref<32x32xf32, #tpu.memory_space<vmem>>, vector<32x32xf32>
    %c0_1 = arith.constant 0 : index
    %c0_2 = arith.constant 0 : index
    %1 = vector.load %arg1[%c0_1, %c0_2] : memref<32x40xf32, #tpu.memory_space<vmem>>, vector<32x40xf32>
    %c0_3 = arith.constant 0 : index
    %c0_4 = arith.constant 0 : index
    %2 = vector.load %arg2[%c0_3, %c0_4] : memref<1x40xf32, #tpu.memory_space<vmem>>, vector<1x40xf32>
    %c0_5 = arith.constant 0 : index
    %c0_6 = arith.constant 0 : index
    %3 = vector.load %arg3[%c0_5, %c0_6] : memref<32x1xi32, #tpu.memory_space<vmem>>, vector<32x1xi32>
    %c0_7 = arith.constant 0 : index
    %c0_8 = arith.constant 0 : index
    %4 = vector.load %arg4[%c0_7, %c0_8] : memref<32x1xi32, #tpu.memory_space<vmem>>, vector<32x1xi32>
    %c0_9 = arith.constant 0 : index
    %c0_10 = arith.constant 0 : index
    %5 = vector.load %arg5[%c0_9, %c0_10] : memref<1x40xi32, #tpu.memory_space<vmem>>, vector<1x40xi32>
    %c0_11 = arith.constant 0 : index
    %c0_12 = arith.constant 0 : index
    %6 = vector.load %arg6[%c0_11, %c0_12] : memref<1x40xi32, #tpu.memory_space<vmem>>, vector<1x40xi32>
    %c0_13 = arith.constant 0 : index
    %c0_14 = arith.constant 0 : index
    %7 = vector.load %arg7[%c0_13, %c0_14] : memref<32x40xf32, #tpu.memory_space<vmem>>, vector<32x40xf32>
    %cst = arith.constant dense<0.000000e+00> : vector<32x40xf32>
    %8 = tpu.matmul %0, %1, %cst {dimension_numbers = #tpu.dot_dimension_numbers<[1], [0], [0], [1], [0, 0, 1, 1], [], []>} : vector<32x32xf32>, vector<32x40xf32>, vector<32x40xf32> -> vector<32x40xf32>
    %9 = vector.broadcast %2 : vector<1x40xf32> to vector<32x40xf32>
    %10 = arith.addf %8, %9 : vector<32x40xf32>
    %11 = vector.broadcast %4 : vector<32x1xi32> to vector<32x40xi32>
    %12 = vector.broadcast %5 : vector<1x40xi32> to vector<32x40xi32>
    %13 = arith.cmpi eq, %11, %12 : vector<32x40xi32>
    %14 = arith.extui %13 : vector<32x40xi1> to vector<32x40xi32>
    %15 = arith.sitofp %14 : vector<32x40xi32> to vector<32x40xf32>
    %cst_15 = arith.constant -1.000000e+30 : f32
    %16 = vector.broadcast %cst_15 : f32 to vector<32x40xf32>
    %17 = arith.select %13, %10, %16 : vector<32x40xi1>, vector<32x40xf32>
    %cst_16 = arith.constant dense<0xFF800000> : vector<32xf32>
    %18 = vector.multi_reduction <maximumf>, %17, %cst_16 [1] : vector<32x40xf32> to vector<32xf32>
    %19 = vector.shape_cast %18 : vector<32xf32> to vector<32x1xf32>
    %20 = vector.broadcast %19 : vector<32x1xf32> to vector<32x40xf32>
    %21 = arith.subf %17, %20 : vector<32x40xf32>
    %22 = math.exp %21 : vector<32x40xf32>
    %cst_17 = arith.constant dense<0.000000e+00> : vector<32xf32>
    %23 = vector.multi_reduction <add>, %22, %cst_17 [1] : vector<32x40xf32> to vector<32xf32>
    %24 = vector.shape_cast %23 : vector<32xf32> to vector<32x1xf32>
    %25 = math.log %24 : vector<32x1xf32>
    %26 = arith.addf %19, %25 : vector<32x1xf32>
    %27 = vector.broadcast %6 : vector<1x40xi32> to vector<32x40xi32>
    %28 = vector.broadcast %3 : vector<32x1xi32> to vector<32x40xi32>
    %29 = arith.cmpi eq, %27, %28 : vector<32x40xi32>
    %30 = arith.andi %13, %29 : vector<32x40xi1>
    %31 = arith.extui %30 : vector<32x40xi1> to vector<32x40xi32>
    %32 = arith.sitofp %31 : vector<32x40xi32> to vector<32x40xf32>
    %33 = arith.mulf %32, %10 : vector<32x40xf32>
    %cst_18 = arith.constant dense<0.000000e+00> : vector<32xf32>
    %34 = vector.multi_reduction <add>, %33, %cst_18 [1] : vector<32x40xf32> to vector<32xf32>
    %35 = vector.shape_cast %34 : vector<32xf32> to vector<32x1xf32>
    %36 = arith.subf %26, %35 : vector<32x1xf32>
    %cst_19 = arith.constant 5.000000e-01 : f32
    %37 = vector.broadcast %cst_19 : f32 to vector<32x40xf32>
    %38 = arith.mulf %7, %37 : vector<32x40xf32>
    %cst_20 = arith.constant dense<0xFF800000> : vector<32xf32>
    %39 = vector.multi_reduction <maximumf>, %38, %cst_20 [1] : vector<32x40xf32> to vector<32xf32>
    %40 = vector.shape_cast %39 : vector<32xf32> to vector<32x1xf32>
    %41 = vector.broadcast %40 : vector<32x1xf32> to vector<32x40xf32>
    %42 = arith.subf %38, %41 : vector<32x40xf32>
    %43 = math.exp %42 : vector<32x40xf32>
    %cst_21 = arith.constant dense<0.000000e+00> : vector<32xf32>
    %44 = vector.multi_reduction <add>, %43, %cst_21 [1] : vector<32x40xf32> to vector<32xf32>
    %45 = vector.shape_cast %44 : vector<32xf32> to vector<32x1xf32>
    %46 = math.log %45 : vector<32x1xf32>
    %47 = arith.addf %40, %46 : vector<32x1xf32>
    %48 = vector.broadcast %47 : vector<32x1xf32> to vector<32x40xf32>
    %49 = arith.subf %38, %48 : vector<32x40xf32>
    %cst_22 = arith.constant 1.38629436 : f32
    %50 = vector.broadcast %cst_22 : f32 to vector<32x40xf32>
    %51 = arith.addf %49, %50 : vector<32x40xf32>
    %52 = math.exp %51 : vector<32x40xf32>
    %53 = arith.mulf %15, %52 : vector<32x40xf32>
    %cst_23 = arith.constant 5.000000e-01 : f32
    %54 = vector.broadcast %cst_23 : f32 to vector<32x40xf32>
    %55 = arith.mulf %17, %54 : vector<32x40xf32>
    %cst_24 = arith.constant 5.000000e-01 : f32
    %56 = vector.broadcast %cst_24 : f32 to vector<32x1xf32>
    %57 = arith.mulf %19, %56 : vector<32x1xf32>
    %58 = vector.broadcast %57 : vector<32x1xf32> to vector<32x40xf32>
    %59 = arith.subf %55, %58 : vector<32x40xf32>
    %60 = math.exp %59 : vector<32x40xf32>
    %cst_25 = arith.constant dense<0.000000e+00> : vector<32xf32>
    %61 = vector.multi_reduction <add>, %60, %cst_25 [1] : vector<32x40xf32> to vector<32xf32>
    %62 = vector.shape_cast %61 : vector<32xf32> to vector<32x1xf32>
    %63 = math.log %62 : vector<32x1xf32>
    %64 = arith.addf %57, %63 : vector<32x1xf32>
    %65 = vector.broadcast %64 : vector<32x1xf32> to vector<32x40xf32>
    %66 = arith.subf %55, %65 : vector<32x40xf32>
    %67 = arith.subf %51, %66 : vector<32x40xf32>
    %68 = arith.mulf %53, %67 : vector<32x40xf32>
    %cst_26 = arith.constant dense<0.000000e+00> : vector<32xf32>
    %69 = vector.multi_reduction <add>, %68, %cst_26 [1] : vector<32x40xf32> to vector<32xf32>
    %70 = vector.shape_cast %69 : vector<32xf32> to vector<32x1xf32>
    %71 = vector.extract_strided_slice %0 {offsets = [24, 0], sizes = [8, 32], strides = [1, 1]} : vector<32x32xf32> to vector<8x32xf32>
    %72 = tpu.concatenate %71, %71, %71, %71 in 0 : vector<8x32xf32>, vector<8x32xf32>, vector<8x32xf32>, vector<8x32xf32> -> vector<32x32xf32>
    %73 = arith.subf %0, %72 : vector<32x32xf32>
    %74 = arith.mulf %73, %73 : vector<32x32xf32>
    %cst_27 = arith.constant dense<0.000000e+00> : vector<32xf32>
    %75 = vector.multi_reduction <add>, %74, %cst_27 [1] : vector<32x32xf32> to vector<32xf32>
    %76 = vector.shape_cast %75 : vector<32xf32> to vector<32x1xf32>
    %cst_28 = arith.constant 6.250000e-02 : f32
    %77 = vector.broadcast %cst_28 : f32 to vector<32x1xf32>
    %78 = arith.mulf %77, %36 : vector<32x1xf32>
    %cst_29 = arith.constant 6.250000e-02 : f32
    %79 = vector.broadcast %cst_29 : f32 to vector<32x1xf32>
    %80 = arith.mulf %79, %70 : vector<32x1xf32>
    %81 = arith.addf %78, %80 : vector<32x1xf32>
    %cst_30 = arith.constant 3.906250e-04 : f32
    %82 = vector.broadcast %cst_30 : f32 to vector<32x1xf32>
    %83 = arith.mulf %82, %76 : vector<32x1xf32>
    %84 = arith.addf %81, %83 : vector<32x1xf32>
    %85 = vector.shape_cast %84 : vector<32x1xf32> to vector<1x32x1xf32>
    %cst_31 = arith.constant dense<0.000000e+00> : vector<1xf32>
    %86 = vector.multi_reduction <add>, %85, %cst_31 [1, 2] : vector<1x32x1xf32> to vector<1xf32>
    %87 = vector.shape_cast %86 : vector<1xf32> to vector<1x1x1xf32>
    %88 = vector.extract %87[0, 0, 0] : f32 from vector<1x1x1xf32>
    %89 = vector.broadcast %88 : f32 to vector<1x1xf32>
    %c0_32 = arith.constant 0 : index
    %c0_33 = arith.constant 0 : index
    %90 = vector.load %arg8[%c0_32, %c0_33] : memref<1x1xf32, #tpu.memory_space<vmem>>, vector<1x1xf32>
    tpu.vector_store %arg8[%c0_32, %c0_33], %89 {strides = array<i32>} : memref<1x1xf32, #tpu.memory_space<vmem>>, vector<1x1xf32>,
    return
  }
}

</mosaic_0001>

<llo_original>
// kernel: tpu_custom_call.1
$region0: #{tpu_custom_call.1}
  #allocation0 [shape = 'u32[]', space=smem, size = 0x4, offset = 0x4, fixed_abs, tag = 'smem constant byte address 0x4 - core index']
  #allocation1 [shape = 'u32[72,128]{1,0:T(1,128)}', space=vmem, size = 0x9000, scoped, tag = 'internal scratch']
  %s0 = inlined_call_operand.vmem [shape: f32[32,32], index: 0, kind: input, shape index: {}]
  %s1 = inlined_call_operand.vmem [shape: f32[32,40], index: 1, kind: input, shape index: {}]
  %s2 = inlined_call_operand.vmem [shape: f32[1,40], index: 2, kind: input, shape index: {}]
  %s3 = inlined_call_operand.vmem [shape: s32[32,1], index: 3, kind: input, shape index: {}]
  %s4 = inlined_call_operand.vmem [shape: s32[32,1], index: 4, kind: input, shape index: {}]
  %s5 = inlined_call_operand.vmem [shape: s32[1,40], index: 5, kind: input, shape index: {}]
  %s6 = inlined_call_operand.vmem [shape: s32[1,40], index: 6, kind: input, shape index: {}]
  %s7 = inlined_call_operand.hbm [shape: f32[32,40], index: 7, kind: input, shape index: {}]
  %s8 = inlined_call_operand.hbm [shape: f32[1,1], index: 8, kind: output, shape index: {}]
  %s9 = sld [smem:[#allocation0]]
  $region46: #{tpu_custom_call.1} parent=0
    _
  %s11 = ssub.s32 1, %s9
  %s12 = scalar_select 0, %s11, %s9
  $region1: #{tpu_custom_call.1} parent=0
    #allocation2 [shape = 'u8[16384]{0}', space=vmem, size = 0x4000, scoped, tag = 'input window, operand 7, single buffered']
    #allocation3 [shape = 's32[1]{0}', space=sflag, size = 0x4, scoped, tag = 'scoped memory for tpu_custom_call.1']
    #allocation4 [shape = 's32[1]{0}', space=sflag, size = 0x4, scoped, tag = 'scoped memory for tpu_custom_call.1']
    #allocation5 [shape = 'u8[512]{0}', space=vmem, size = 0x400, scoped, tag = 'output window, operand 0, single buffered']
    %13 = vsyncpa [#allocation3], 0
    %14 = vsyncpa [#allocation4], 0
    // Predicated region
    $region2: #{tpu_custom_call.1} parent=1 // pred_check
      _
    $region3: #{tpu_custom_call.1} parent=1 // pred_check_branch
      %16 = sbr.rel (0) target = $region5
    $region4: #{tpu_custom_call.1} parent=1 // pred_region
      _
    $region5: #{tpu_custom_call.1} parent=1 // pred_fallthru
      _
    // Predicated region
    $region6: #{tpu_custom_call.1} parent=1 // pred_check
      _
    $region7: #{tpu_custom_call.1} parent=1 // pred_check_branch
      %18 = sbr.rel (0) target = $region9
    $region8: #{tpu_custom_call.1} parent=1 // pred_region
      _
    $region9: #{tpu_custom_call.1} parent=1 // pred_fallthru
      _
    // Predicated region
    $region10: #{tpu_custom_call.1} parent=1 // pred_check
      _
    $region11: #{tpu_custom_call.1} parent=1 // pred_check_branch
      %20 = sbr.rel (0) target = $region13
    $region12: #{tpu_custom_call.1} parent=1 // pred_region
      _
    $region13: #{tpu_custom_call.1} parent=1 // pred_fallthru
      _
    // Predicated region
    $region14: #{tpu_custom_call.1} parent=1 // pred_check
      _
    $region15: #{tpu_custom_call.1} parent=1 // pred_check_branch
      %22 = sbr.rel (0) target = $region17
    $region16: #{tpu_custom_call.1} parent=1 // pred_region
      _
    $region17: #{tpu_custom_call.1} parent=1 // pred_fallthru
      _
    // Predicated region
    $region18: #{tpu_custom_call.1} parent=1 // pred_check
      _
    $region19: #{tpu_custom_call.1} parent=1 // pred_check_branch
      %24 = sbr.rel (0) target = $region21
    $region20: #{tpu_custom_call.1} parent=1 // pred_region
      _
    $region21: #{tpu_custom_call.1} parent=1 // pred_fallthru
      _
    // Predicated region
    $region22: #{tpu_custom_call.1} parent=1 // pred_check
      _
    $region23: #{tpu_custom_call.1} parent=1 // pred_check_branch
      %26 = sbr.rel (0) target = $region25
    $region24: #{tpu_custom_call.1} parent=1 // pred_region
      _
    $region25: #{tpu_custom_call.1} parent=1 // pred_fallthru
      _
    // Predicated region
    $region26: #{tpu_custom_call.1} parent=1 // pred_check
      _
    $region27: #{tpu_custom_call.1} parent=1 // pred_check_branch
      %28 = sbr.rel (0) target = $region29
    $region28: #{tpu_custom_call.1} parent=1 // pred_region
      _
    $region29: #{tpu_custom_call.1} parent=1 // pred_fallthru
      _
    // Predicated region
    $region30: #{tpu_custom_call.1} parent=1 // pred_check
      _
    $region31: #{tpu_custom_call.1} parent=1 // pred_check_branch
      %30 = sbr.rel (0) target = $region33
    $region32: #{tpu_custom_call.1} parent=1 // pred_region
      %32 = vsyncadd [#allocation3], 0
      %s33 = sshll.u32 %s7, 4
      %s34 = int_to_ptr.hbm [resolvable:$true] %s33
      %s35 = sshll.u32 [#allocation2], 4
      %s36 = int_to_ptr.vmem [resolvable:$true] %s35
      %41 = dma.hbm_to_vmem [thread:$0]  %s34, 512, %s36, [#allocation3], 128, 128, 8
    $region33: #{tpu_custom_call.1} parent=1 // pred_fallthru
      _
    // Predicated region
    $region34: #{tpu_custom_call.1} parent=1 // pred_check
      _
    $region35: #{tpu_custom_call.1} parent=1 // pred_check_branch
      %43 = sbr.rel (0) target = $region37
    $region36: #{tpu_custom_call.1} parent=1 // pred_region
      %45 = dma.done [#allocation3], 512
    $region37: #{tpu_custom_call.1} parent=1 // pred_fallthru
      _
    %v46 = vld [vmem:[%s0] sm:$0xff]
    %v47 = vld [vmem:[%s0 + $0x8] sm:$0xff]
    %v48 = vld [vmem:[%s0 + $0x10] sm:$0xff]
    %v49 = vld [vmem:[%s0 + $0x18] sm:$0xff]
    %v50 = vld [vmem:[%s1] sm:$0xff]
    %v51 = vld [vmem:[%s1 + $0x8] sm:$0xff]
    %v52 = vld [vmem:[%s1 + $0x10] sm:$0xff]
    %v53 = vld [vmem:[%s1 + $0x18] sm:$0xff]
    %v54 = vld [vmem:[%s2] sm:$0x1]
    %v55 = vld [vmem:[%s3] sm:$0xff]
    %v56 = vld [vmem:[%s3 + $0x8] sm:$0xff]
    %v57 = vld [vmem:[%s3 + $0x10] sm:$0xff]
    %v58 = vld [vmem:[%s3 + $0x18] sm:$0xff]
    %v59 = vld [vmem:[%s4] sm:$0xff]
    %v60 = vld [vmem:[%s4 + $0x8] sm:$0xff]
    %v61 = vld [vmem:[%s4 + $0x10] sm:$0xff]
    %v62 = vld [vmem:[%s4 + $0x18] sm:$0xff]
    %v63 = vld [vmem:[%s5] sm:$0x1]
    %v64 = vld [vmem:[%s6] sm:$0x1]
    %v65 = vld [vmem:[#allocation2] sm:$0xff]
    %v66 = vld [vmem:[#allocation2 + $0x8] sm:$0xff]
    %v67 = vld [vmem:[#allocation2 + $0x10] sm:$0xff]
    %v68 = vld [vmem:[#allocation2 + $0x18] sm:$0xff]
    %v70 = vperm.slane %v54, 0
    %vm72 = vcmask 261120
    %v74 = vsel %vm72, %v46, 0
    %v77 = vsel %vm72, %v47, 0
    %v80 = vsel %vm72, %v48, 0
    %v83 = vsel %vm72, %v49, 0
    %85 = vmatpush.msra.mxu0 0.0
    %86 = vmatpush.msra.mxu0 0.0
    %87 = vmatpush.msra.mxu0 0.0
    %88 = vmatpush.msra.mxu0 0.0
    %89 = vmatpush.msra.mxu0 0.0
    %90 = vmatpush.msra.mxu0 0.0
    %91 = vmatpush.msra.mxu0 0.0
    %92 = vmatpush.msra.mxu0 0.0
    %93 = vmatpush.msra.mxu0 0.0
    %94 = vmatpush.msra.mxu0 0.0
    %95 = vmatpush.msra.mxu0 0.0
    %96 = vmatpush.msra.mxu0 0.0
    %97 = vmatpush.msra.mxu0 %v53
    %98 = vmatpush.msra.mxu0 %v52
    %99 = vmatpush.msra.mxu0 %v51
    %100 = vmatpush.msra.mxu0 %v50
    %101 = vmatmul.f32.gmra.mxu0 %v74
    %v102 = vpop.f32.mrf.mxu0
    %v103 = vadd.f32 %v70, %v102
    %104 = vmatmul.f32.gmra.mxu0 %v77
    %v105 = vpop.f32.mrf.mxu0
    %v106 = vadd.f32 %v70, %v105
    %107 = vmatmul.f32.gmra.mxu0 %v80
    %v108 = vpop.f32.mrf.mxu0
    %v109 = vadd.f32 %v70, %v108
    %110 = vmatmul.f32.gmra.mxu0 %v83
    %v111 = vpop.f32.mrf.mxu0
    %v112 = vadd.f32 %v70, %v111
    %113 = vdwg.mxu0
    %114 = vset.pattern.permute.xlu0 0
    %115 = vperm.xlu0 %114, %v59
    %v116 = vpop.permute.xlu0 %115
    %117 = vset.pattern.permute.xlu0 0
    %118 = vperm.xlu0 %117, %v60
    %v119 = vpop.permute.xlu0 %118
    %120 = vset.pattern.permute.xlu0 0
    %121 = vperm.xlu0 %120, %v61
    %v122 = vpop.permute.xlu0 %121
    %123 = vset.pattern.permute.xlu0 0
    %124 = vperm.xlu0 %123, %v62
    %v125 = vpop.permute.xlu0 %124
    %v126 = vperm.slane %v63, 0
    %vm127 = vcmp.eq.s32.totalorder %v116, %v126
    %vm128 = vcmp.eq.s32.totalorder %v119, %v126
    %vm129 = vcmp.eq.s32.totalorder %v122, %v126
    %vm130 = vcmp.eq.s32.totalorder %v125, %v126
    %v131 = vsel %vm127, 1, 0
    %v132 = vsel %vm128, 1, 0
    %v133 = vsel %vm129, 1, 0
    %v134 = vsel %vm130, 1, 0
    %v135 = vcvt.s32.f32 %v131
    %v136 = vcvt.s32.f32 %v132
    %v137 = vcvt.s32.f32 %v133
    %v138 = vcvt.s32.f32 %v134
    %v139 = vsel %vm127, %v103, -1e+30
    %v140 = vsel %vm128, %v106, -1e+30
    %v141 = vsel %vm129, %v109, -1e+30
    %v142 = vsel %vm130, %v112, -1e+30
    %vm143 = vcmask 326656
    %v144 = vsel %vm143, %v139, -inf
    %145 = vmax.xlane.f32.xlu0 %v144
    %v146 = vpop.xlane.xlu0 %145
    %v147 = vsel %vm143, %v140, -inf
    %148 = vmax.xlane.f32.xlu0 %v147
    %v149 = vpop.xlane.xlu0 %148
    %v150 = vsel %vm143, %v141, -inf
    %151 = vmax.xlane.f32.xlu0 %v150
    %v152 = vpop.xlane.xlu0 %151
    %v153 = vsel %vm143, %v142, -inf
    %154 = vmax.xlane.f32.xlu0 %v153
    %v155 = vpop.xlane.xlu0 %154
    %v156 = vsub.f32 %v139, %v146
    %v157 = vsub.f32 %v140, %v149
    %v158 = vsub.f32 %v141, %v152
    %v159 = vsub.f32 %v142, %v155
    %v160 = vmul.f32 %v156, 1.442695
    %v161 = vpow.pop %v160
    %v162 = vmul.f32 %v157, 1.442695
    %v163 = vpow.pop %v162
    %v164 = vmul.f32 %v158, 1.442695
    %v165 = vpow.pop %v164
    %v166 = vmul.f32 %v159, 1.442695
    %v167 = vpow.pop %v166
    %v168 = vsel %vm143, %v161, 0.0
    %169 = vadd.xlane.f32.xlu0 %v168
    %v170 = vpop.xlane.xlu0 %169
    %v171 = vsel %vm143, %v163, 0.0
    %172 = vadd.xlane.f32.xlu0 %v171
    %v173 = vpop.xlane.xlu0 %172
    %v174 = vsel %vm143, %v165, 0.0
    %175 = vadd.xlane.f32.xlu0 %v174
    %v176 = vpop.xlane.xlu0 %175
    %v177 = vsel %vm143, %v167, 0.0
    %178 = vadd.xlane.f32.xlu0 %v177
    %v179 = vpop.xlane.xlu0 %178
    %v180 = vlog2.pop %v170
    %v181 = vmul.f32 %v180, 0.6931472
    %v182 = vlog2.pop %v173
    %v183 = vmul.f32 %v182, 0.6931472
    %v184 = vlog2.pop %v176
    %v185 = vmul.f32 %v184, 0.6931472
    %v186 = vlog2.pop %v179
    %v187 = vmul.f32 %v186, 0.6931472
    %v188 = vadd.f32 %v146, %v181
    %v189 = vadd.f32 %v149, %v183
    %v190 = vadd.f32 %v152, %v185
    %v191 = vadd.f32 %v155, %v187
    %v192 = vperm.slane %v64, 0
    %193 = vset.pattern.permute.xlu0 0
    %194 = vperm.xlu0 %193, %v55
    %v195 = vpop.permute.xlu0 %194
    %196 = vset.pattern.permute.xlu0 0
    %197 = vperm.xlu0 %196, %v56
    %v198 = vpop.permute.xlu0 %197
    %199 = vset.pattern.permute.xlu0 0
    %200 = vperm.xlu0 %199, %v57
    %v201 = vpop.permute.xlu0 %200
    %202 = vset.pattern.permute.xlu0 0
    %203 = vperm.xlu0 %202, %v58
    %v204 = vpop.permute.xlu0 %203
    %vm205 = vcmp.eq.s32.totalorder %v192, %v195
    %vm206 = vcmp.eq.s32.totalorder %v192, %v198
    %vm207 = vcmp.eq.s32.totalorder %v192, %v201
    %vm208 = vcmp.eq.s32.totalorder %v192, %v204
    %vm209 = vmand %vm127, %vm205
    %vm210 = vmand %vm128, %vm206
    %vm211 = vmand %vm129, %vm207
    %vm212 = vmand %vm130, %vm208
    %v213 = vsel %vm209, 1, 0
    %v214 = vsel %vm210, 1, 0
    %v215 = vsel %vm211, 1, 0
    %v216 = vsel %vm212, 1, 0
    %v217 = vcvt.s32.f32 %v213
    %v218 = vcvt.s32.f32 %v214
    %v219 = vcvt.s32.f32 %v215
    %v220 = vcvt.s32.f32 %v216
    %v221 = vmul.f32 %v217, %v103
    %v222 = vmul.f32 %v218, %v106
    %v223 = vmul.f32 %v219, %v109
    %v224 = vmul.f32 %v220, %v112
    %v225 = vsel %vm143, %v221, 0.0
    %226 = vadd.xlane.f32.xlu0 %v225
    %v227 = vpop.xlane.xlu0 %226
    %v228 = vsel %vm143, %v222, 0.0
    %229 = vadd.xlane.f32.xlu0 %v228
    %v230 = vpop.xlane.xlu0 %229
    %v231 = vsel %vm143, %v223, 0.0
    %232 = vadd.xlane.f32.xlu0 %v231
    %v233 = vpop.xlane.xlu0 %232
    %v234 = vsel %vm143, %v224, 0.0
    %235 = vadd.xlane.f32.xlu0 %v234
    %v236 = vpop.xlane.xlu0 %235
    %v237 = vsub.f32 %v188, %v227
    %v238 = vsub.f32 %v189, %v230
    %v239 = vsub.f32 %v190, %v233
    %v240 = vsub.f32 %v191, %v236
    %v241 = vmul.f32 %v65, 0.5
    %v242 = vmul.f32 %v66, 0.5
    %v243 = vmul.f32 %v67, 0.5
    %v244 = vmul.f32 %v68, 0.5
    %v245 = vsel %vm143, %v241, -inf
    %246 = vmax.xlane.f32.xlu0 %v245
    %v247 = vpop.xlane.xlu0 %246
    %v248 = vsel %vm143, %v242, -inf
    %249 = vmax.xlane.f32.xlu0 %v248
    %v250 = vpop.xlane.xlu0 %249
    %v251 = vsel %vm143, %v243, -inf
    %252 = vmax.xlane.f32.xlu0 %v251
    %v253 = vpop.xlane.xlu0 %252
    %v254 = vsel %vm143, %v244, -inf
    %255 = vmax.xlane.f32.xlu0 %v254
    %v256 = vpop.xlane.xlu0 %255
    %v257 = vsub.f32 %v241, %v247
    %v258 = vsub.f32 %v242, %v250
    %v259 = vsub.f32 %v243, %v253
    %v260 = vsub.f32 %v244, %v256
    %v261 = vmul.f32 %v257, 1.442695
    %v262 = vpow.pop %v261
    %v263 = vmul.f32 %v258, 1.442695
    %v264 = vpow.pop %v263
    %v265 = vmul.f32 %v259, 1.442695
    %v266 = vpow.pop %v265
    %v267 = vmul.f32 %v260, 1.442695
    %v268 = vpow.pop %v267
    %v269 = vsel %vm143, %v262, 0.0
    %270 = vadd.xlane.f32.xlu0 %v269
    %v271 = vpop.xlane.xlu0 %270
    %v272 = vsel %vm143, %v264, 0.0
    %273 = vadd.xlane.f32.xlu0 %v272
    %v274 = vpop.xlane.xlu0 %273
    %v275 = vsel %vm143, %v266, 0.0
    %276 = vadd.xlane.f32.xlu0 %v275
    %v277 = vpop.xlane.xlu0 %276
    %v278 = vsel %vm143, %v268, 0.0
    %279 = vadd.xlane.f32.xlu0 %v278
    %v280 = vpop.xlane.xlu0 %279
    %v281 = vlog2.pop %v271
    %v282 = vmul.f32 %v281, 0.6931472
    %v283 = vlog2.pop %v274
    %v284 = vmul.f32 %v283, 0.6931472
    %v285 = vlog2.pop %v277
    %v286 = vmul.f32 %v285, 0.6931472
    %v287 = vlog2.pop %v280
    %v288 = vmul.f32 %v287, 0.6931472
    %v289 = vadd.f32 %v247, %v282
    %v290 = vadd.f32 %v250, %v284
    %v291 = vadd.f32 %v253, %v286
    %v292 = vadd.f32 %v256, %v288
    %v293 = vsub.f32 %v241, %v289
    %v294 = vsub.f32 %v242, %v290
    %v295 = vsub.f32 %v243, %v291
    %v296 = vsub.f32 %v244, %v292
    %v297 = vadd.f32 %v293, 1.3862944
    %v298 = vadd.f32 %v294, 1.3862944
    %v299 = vadd.f32 %v295, 1.3862944
    %v300 = vadd.f32 %v296, 1.3862944
    %v301 = vmul.f32 %v297, 1.442695
    %v302 = vpow.pop %v301
    %v303 = vmul.f32 %v298, 1.442695
    %v304 = vpow.pop %v303
    %v305 = vmul.f32 %v299, 1.442695
    %v306 = vpow.pop %v305
    %v307 = vmul.f32 %v300, 1.442695
    %v308 = vpow.pop %v307
    %v309 = vmul.f32 %v135, %v302
    %v310 = vmul.f32 %v136, %v304
    %v311 = vmul.f32 %v137, %v306
    %v312 = vmul.f32 %v138, %v308
    %v313 = vmul.f32 %v139, 0.5
    %v314 = vmul.f32 %v140, 0.5
    %v315 = vmul.f32 %v141, 0.5
    %v316 = vmul.f32 %v142, 0.5
    %v317 = vmul.f32 %v146, 0.5
    %v318 = vmul.f32 %v149, 0.5
    %v319 = vmul.f32 %v152, 0.5
    %v320 = vmul.f32 %v155, 0.5
    %v321 = vsub.f32 %v313, %v317
    %v322 = vsub.f32 %v314, %v318
    %v323 = vsub.f32 %v315, %v319
    %v324 = vsub.f32 %v316, %v320
    %v325 = vmul.f32 %v321, 1.442695
    %v326 = vpow.pop %v325
    %v327 = vmul.f32 %v322, 1.442695
    %v328 = vpow.pop %v327
    %v329 = vmul.f32 %v323, 1.442695
    %v330 = vpow.pop %v329
    %v331 = vmul.f32 %v324, 1.442695
    %v332 = vpow.pop %v331
    %v333 = vsel %vm143, %v326, 0.0
    %334 = vadd.xlane.f32.xlu0 %v333
    %v335 = vpop.xlane.xlu0 %334
    %v336 = vsel %vm143, %v328, 0.0
    %337 = vadd.xlane.f32.xlu0 %v336
    %v338 = vpop.xlane.xlu0 %337
    %v339 = vsel %vm143, %v330, 0.0
    %340 = vadd.xlane.f32.xlu0 %v339
    %v341 = vpop.xlane.xlu0 %340
    %v342 = vsel %vm143, %v332, 0.0
    %343 = vadd.xlane.f32.xlu0 %v342
    %v344 = vpop.xlane.xlu0 %343
    %v345 = vlog2.pop %v335
    %v346 = vmul.f32 %v345, 0.6931472
    %v347 = vlog2.pop %v338
    %v348 = vmul.f32 %v347, 0.6931472
    %v349 = vlog2.pop %v341
    %v350 = vmul.f32 %v349, 0.6931472
    %v351 = vlog2.pop %v344
    %v352 = vmul.f32 %v351, 0.6931472
    %v353 = vadd.f32 %v317, %v346
    %v354 = vadd.f32 %v318, %v348
    %v355 = vadd.f32 %v319, %v350
    %v356 = vadd.f32 %v320, %v352
    %v357 = vsub.f32 %v313, %v353
    %v358 = vsub.f32 %v314, %v354
    %v359 = vsub.f32 %v315, %v355
    %v360 = vsub.f32 %v316, %v356
    %v361 = vsub.f32 %v297, %v357
    %v362 = vsub.f32 %v298, %v358
    %v363 = vsub.f32 %v299, %v359
    %v364 = vsub.f32 %v300, %v360
    %v365 = vmul.f32 %v309, %v361
    %v366 = vmul.f32 %v310, %v362
    %v367 = vmul.f32 %v311, %v363
    %v368 = vmul.f32 %v312, %v364
    %v369 = vsel %vm143, %v365, 0.0
    %370 = vadd.xlane.f32.xlu0 %v369
    %v371 = vpop.xlane.xlu0 %370
    %v372 = vsel %vm143, %v366, 0.0
    %373 = vadd.xlane.f32.xlu0 %v372
    %v374 = vpop.xlane.xlu0 %373
    %v375 = vsel %vm143, %v367, 0.0
    %376 = vadd.xlane.f32.xlu0 %v375
    %v377 = vpop.xlane.xlu0 %376
    %v378 = vsel %vm143, %v368, 0.0
    %379 = vadd.xlane.f32.xlu0 %v378
    %v380 = vpop.xlane.xlu0 %379
    %v381 = vsub.f32 %v46, %v49
    %v382 = vsub.f32 %v47, %v49
    %v383 = vsub.f32 %v48, %v49
    %v384 = vsub.f32 %v49, %v49
    %v385 = vmul.f32 %v381, %v381
    %v386 = vmul.f32 %v382, %v382
    %v387 = vmul.f32 %v383, %v383
    %v388 = vmul.f32 %v384, %v384
    %v389 = vsel %vm72, %v385, 0.0
    %390 = vadd.xlane.f32.xlu0 %v389
    %v391 = vpop.xlane.xlu0 %390
    %v392 = vsel %vm72, %v386, 0.0
    %393 = vadd.xlane.f32.xlu0 %v392
    %v394 = vpop.xlane.xlu0 %393
    %v395 = vsel %vm72, %v387, 0.0
    %396 = vadd.xlane.f32.xlu0 %v395
    %v397 = vpop.xlane.xlu0 %396
    %v398 = vsel %vm72, %v388, 0.0
    %399 = vadd.xlane.f32.xlu0 %v398
    %v400 = vpop.xlane.xlu0 %399
    %v401 = vmul.f32 %v237, 0.0625
    %v402 = vmul.f32 %v238, 0.0625
    %v403 = vmul.f32 %v239, 0.0625
    %v404 = vmul.f32 %v240, 0.0625
    %v405 = vmul.f32 %v371, 0.0625
    %v406 = vmul.f32 %v374, 0.0625
    %v407 = vmul.f32 %v377, 0.0625
    %v408 = vmul.f32 %v380, 0.0625
    %v409 = vadd.f32 %v401, %v405
    %v410 = vadd.f32 %v402, %v406
    %v411 = vadd.f32 %v403, %v407
    %v412 = vadd.f32 %v404, %v408
    %v413 = vmul.f32 %v391, 0.000390625
    %v414 = vmul.f32 %v394, 0.000390625
    %v415 = vmul.f32 %v397, 0.000390625
    %v416 = vmul.f32 %v400, 0.000390625
    %v417 = vadd.f32 %v409, %v413
    %v418 = vadd.f32 %v410, %v414
    %v419 = vadd.f32 %v411, %v415
    %v420 = vadd.f32 %v412, %v416
    %vm421 = vcmask 7168
    %v422 = vsel %vm421, %v417, 0.0
    %v423 = vsel %vm421, %v418, 0.0
    %v424 = vadd.f32 %v422, %v423
    %v425 = vsel %vm421, %v419, 0.0
    %v426 = vadd.f32 %v424, %v425
    %v427 = vsel %vm421, %v420, 0.0
    %v428 = vadd.f32 %v426, %v427
    %429 = vadd.xlane.f32.xlu0 %v428
    %v430 = vpop.xlane.xlu0 %429
    %v431 = vrot.slane %v430, 4
    %v432 = vadd.f32 %v430, %v431
    %v433 = vrot.slane %v432, 2
    %v434 = vadd.f32 %v432, %v433
    %v435 = vrot.slane %v434, 1
    %v436 = vadd.f32 %v434, %v435
    %s437 = vtos %v436
    %v438 = vstv %s437
    %vm439 = vcmask 0
    %440 = vst.msk [vmem:[#allocation5] sm:$0x1] %vm439, %v438
    // Predicated region
    $region38: #{tpu_custom_call.1} parent=1 // pred_check
      _
    $region39: #{tpu_custom_call.1} parent=1 // pred_check_branch
      %442 = sbr.rel (0) target = $region41
    $region40: #{tpu_custom_call.1} parent=1 // pred_region
      %444 = vsyncadd [#allocation4], 0
      %s446 = sshll.u32 [#allocation5], 4
      %s447 = int_to_ptr.vmem [resolvable:$true] %s446
      %s448 = sshll.u32 %s8, 4
      %s449 = int_to_ptr.hbm [resolvable:$true] %s448
      %451 = dma.vmem_to_hbm [thread:$0]  %s447, 16, %s449, [#allocation4]
    $region41: #{tpu_custom_call.1} parent=1 // pred_fallthru
      _
    // Predicated region
    $region42: #{tpu_custom_call.1} parent=1 // pred_check
      _
    $region43: #{tpu_custom_call.1} parent=1 // pred_check_branch
      %453 = sbr.rel (0) target = $region45
    $region44: #{tpu_custom_call.1} parent=1 // pred_region
      %455 = dma.done [#allocation4], 16
    $region45: #{tpu_custom_call.1} parent=1 // pred_fallthru
      _
    %456 = vsyncpa [#allocation3], 1
    %457 = vsyncpa [#allocation4], 1

</llo_original>
